<compile_context>
chip_gen: v6e
topology: v6e:2x2x1
jax: 0.10.0
libtpu: 0.0.40
codegen_flags: <defaults>
</compile_context>

<pallas_src>
import jax
import jax.numpy as jnp
from jax.experimental import pallas as pl
from jax.experimental.pallas import tpu as pltpu


def _zca_affine_kernel(x_ref, w_ref, c_ref, o_ref):
    """o = x @ w + c  (one batch tile; w/c already hold the folded parameters)."""
    y = jnp.dot(x_ref[...], w_ref[...], preferred_element_type=jnp.float32)
    o_ref[...] = (y + c_ref[...]).astype(o_ref.dtype)


def _vmem_budget_and_min_steps():
    """Generation-aware scoped-VMEM budget and minimum batch-grid steps."""
    phys = 128 * 1024 * 1024
    try:
        info = pltpu.get_tpu_info()
        phys = int(getattr(info, "vmem_capacity_bytes", phys))
    except Exception:  # API unavailable -> conservative (v7x-sized) default
        phys = 64 * 1024 * 1024
    if phys <= 64 * 1024 * 1024:
        # v7x-class: 64 MiB physical VMEM per TensorCore, 2 TCs per chip.
        # Keep headroom and make sure both cores get at least one batch tile.
        return 48 * 1024 * 1024, 2
    # v5e / v6e: 128 MiB physical VMEM, single TensorCore per chip.
    return 64 * 1024 * 1024, 1


def _choose_batch_tile(n, c_in, c_out, resident_bytes, budget_bytes,
                       min_grid_steps, itemsize):
    """Largest multiple-of-8 batch tile whose double-buffered x/out blocks fit
    the scoped-VMEM budget next to the resident weight/bias buffers."""
    slack = 2 * 1024 * 1024                        # compiler scratch / sems
    avail = budget_bytes - resident_bytes - slack
    per_row = 2 * itemsize * (c_in + c_out)        # 2 pipeline buffers each
    rows = max(8, avail // per_row)
    tn = max(8, min((rows // 8) * 8, 4096))
    # Do not exceed N (rounded down to the sublane granule); a partial last
    # block is fine, a block much larger than N is pointless.
    tn = min(tn, max(8, (n // 8) * 8))
    # On multi-TensorCore parts make sure the parallel batch axis has work
    # for every core.
    if min_grid_steps > 1 and n > 8:
        cap = -(-n // min_grid_steps)              # ceil(n / min_grid_steps)
        cap = ((cap + 7) // 8) * 8
        tn = min(tn, max(8, cap))
    return tn


def zca1_forward(x, running_mean, running_subspaces, weight, bias, groups):
    """Eval-mode ZCA1 forward.

    x:                  (N, C) float32   (native layout, no transposes needed)
    running_mean:       (C, 1)
    running_subspaces:  (G, L, L)  with L = C // G
    weight, bias:       (C, 1)
    returns:            (N, C)
    """
    N, C = x.shape
    G = groups
    assert C % G == 0
    L = C // G
    dtype = x.dtype
    itemsize = jnp.dtype(dtype).itemsize

    # ---- wrapper-side parameter folding (tiny, O(C*L)) --------------------
    #   out = x @ W_eff + c_eff  reproduces  ((S @ (x^T - mu)) * w + b)^T
    #   W_eff = blockdiag(S_g)^T * weight_row
    #   c_eff = (bias - weight * (S @ running_mean))^T
    mu_g = running_mean.reshape(G, L)
    s_mu = jnp.einsum("gij,gj->gi", running_subspaces, mu_g).reshape(C)
    c_eff = (bias.reshape(C) - weight.reshape(C) * s_mu).reshape(1, C).astype(dtype)
    # Per-group folded weight blocks: S_g^T scaled column-wise by weight_g.
    w_blocks = (jnp.transpose(running_subspaces, (0, 2, 1))
                * weight.reshape(G, 1, L)).astype(dtype)        # (G, L, L)

    budget, min_steps = _vmem_budget_and_min_steps()

    # Per-group grid only pays off when each group block is lane-dense
    # (L a multiple of 128); otherwise fold to one dense (C, C) GEMM.
    use_grouped = G > 1 and L % 128 == 0

    if use_grouped:
        # Weight block changes with the group axis -> keep default 2 buffers.
        resident = 2 * L * L * itemsize + 2 * L * itemsize
        tn = _choose_batch_tile(N, L, L, resident, budget, min_steps, itemsize)
        num_tiles = -(-N // tn)
        cost = pl.CostEstimate(
            flops=2 * N * C * L,
            transcendentals=0,
            bytes_accessed=itemsize * (2 * N * C + G * L * L + C),
        )
        return pl.pallas_call(
            _zca_affine_kernel,
            out_shape=jax.ShapeDtypeStruct((N, C), dtype),
            grid_spec=pl.GridSpec(
                grid=(num_tiles, G),
                in_specs=[
                    pl.BlockSpec((tn, L), lambda i, g: (i, g)),
                    pl.BlockSpec((None, L, L), lambda i, g: (g, 0, 0)),
                    pl.BlockSpec((1, L), lambda i, g: (0, g)),
                ],
                out_specs=pl.BlockSpec((tn, L), lambda i, g: (i, g)),
            ),
            compiler_params=pltpu.CompilerParams(
                dimension_semantics=("parallel", "parallel"),
                vmem_limit_bytes=budget,
            ),
            cost_estimate=cost,
        )(x, w_blocks, c_eff)

    # Dense fold: small L, the block-diagonal zeros are cheap MXU filler.
    # TODO(synk): for very large C with small L (the resident (C,C) weight no
    # longer fits the VMEM budget) the contraction axis would also need
    # tiling; not needed at the sizes exercised here.
    w_eff = jax.scipy.linalg.block_diag(
        *[w_blocks[g] for g in range(G)]
    ).astype(dtype)                                              # (C, C)

    resident = C * C * itemsize + C * itemsize     # single-buffered W and c
    tn = _choose_batch_tile(N, C, C, resident, budget, min_steps, itemsize)
    num_tiles = -(-N // tn)
    cost = pl.CostEstimate(
        flops=2 * N * C * C,
        transcendentals=0,
        bytes_accessed=itemsize * (2 * N * C + C * C + C),
    )
    return pl.pallas_call(
        _zca_affine_kernel,
        out_shape=jax.ShapeDtypeStruct((N, C), dtype),
        grid_spec=pl.GridSpec(
            grid=(num_tiles,),
            in_specs=[
                pl.BlockSpec((tn, C), lambda i: (i, 0)),
                # Constant index_map -> a single pipeline buffer is enough.
                pl.BlockSpec((C, C), lambda i: (0, 0),
                             pipeline_mode=pl.Buffered(1)),
                pl.BlockSpec((1, C), lambda i: (0, 0),
                             pipeline_mode=pl.Buffered(1)),
            ],
            out_specs=pl.BlockSpec((tn, C), lambda i: (i, 0)),
        ),
        compiler_params=pltpu.CompilerParams(
            dimension_semantics=("parallel",),
            vmem_limit_bytes=budget,
        ),
        cost_estimate=cost,
    )(x, w_eff, c_eff)


def zca1_reference(x, running_mean, running_subspaces, weight, bias, groups):
    """Plain-JAX reference of the PyTorch eval-mode forward (for validation)."""
    N, C = x.shape
    G = groups
    L = C // G
    xt = jnp.transpose(x)                        # (C, N)
    xt = xt - running_mean                       # (C, N) - (C, 1)
    xg = xt.reshape(G, L, N)
    yg = jnp.einsum("gij,gjn->gin", running_subspaces, xg)
    y = yg.reshape(C, N)
    y = y * weight + bias
    return jnp.transpose(y)                      # (N, C)


if __name__ == "__main__":
    def make_inputs(key, batch, num_features, groups):
        # Consistent with ZCA1.__init__ / reset_parameters(), with buffers
        # perturbed away from their init values so the mean/subspace/affine
        # fold is actually exercised.
        L = num_features // groups
        k_x, k_w, k_b, k_m, k_s = jax.random.split(key, 5)
        x = jax.random.normal(k_x, (batch, num_features), dtype=jnp.float32)
        weight = jax.random.uniform(k_w, (num_features, 1), dtype=jnp.float32)
        bias = 0.1 * jax.random.normal(k_b, (num_features, 1), dtype=jnp.float32)
        running_mean = 0.5 * jax.random.normal(k_m, (num_features, 1), dtype=jnp.float32)
        running_subspaces = (
            jnp.broadcast_to(jnp.eye(L, dtype=jnp.float32), (groups, L, L))
            + 0.05 * jax.random.normal(k_s, (groups, L, L), dtype=jnp.float32)
        )
        return x, running_mean, running_subspaces, weight, bias

    # Case 1: small shapes consistent with the module (dense-fold path).
    # Case 2: L = C // G = 128 and N not a multiple of the tile -> exercises
    #         the per-group grid and the masked partial last batch block.
    cases = [
        dict(batch=8, num_features=16, groups=2, tol=1e-4),
        dict(batch=20, num_features=256, groups=2, tol=5e-4),
    ]

    key = jax.random.PRNGKey(0)
    for cfg in cases:
        key, sub = jax.random.split(key)
        x, rm, rs, w, b = make_inputs(sub, cfg["batch"], cfg["num_features"],
                                      cfg["groups"])
        out = zca1_forward(x, rm, rs, w, b, cfg["groups"])
        out = jax.block_until_ready(out)
        ref = zca1_reference(x, rm, rs, w, b, cfg["groups"])
        assert out.shape == (cfg["batch"], cfg["num_features"])
        err = float(jnp.max(jnp.abs(out - ref)))
        assert jnp.allclose(out, ref, atol=cfg["tol"], rtol=cfg["tol"]), (cfg, err)

    print("KERNEL_OK")
</pallas_src>

<mosaic_0001>
module attributes {stable_mosaic.version = 11 : i64} {
  func.func @_zca_affine_kernel(%arg0: i32, %arg1: memref<8x16xf32, #tpu.memory_space<vmem>>, %arg2: memref<16x16xf32, #tpu.memory_space<vmem>>, %arg3: memref<1x16xf32, #tpu.memory_space<vmem>>, %arg4: memref<8x16xf32, #tpu.memory_space<vmem>>) attributes {dimension_semantics = [#tpu.dimension_semantics<parallel>], iteration_bounds = array<i64: 1>, scalar_prefetch = 0 : i64, scratch_operands = 0 : i64, tpu.core_type = #tpu.core_type<tc>, window_params = [{transform_indices = @transform_0, window_bounds = array<i64: 8, 16>}, {pipeline_mode = #tpu.pipeline_mode<synchronous>, transform_indices = @transform_1, window_bounds = array<i64: 16, 16>}, {pipeline_mode = #tpu.pipeline_mode<synchronous>, transform_indices = @transform_2, window_bounds = array<i64: 1, 16>}, {transform_indices = @transform_3, window_bounds = array<i64: 8, 16>}]} {
    %c0 = arith.constant 0 : index
    %c0_0 = arith.constant 0 : index
    %0 = vector.load %arg1[%c0, %c0_0] : memref<8x16xf32, #tpu.memory_space<vmem>>, vector<8x16xf32>
    %c0_1 = arith.constant 0 : index
    %c0_2 = arith.constant 0 : index
    %1 = vector.load %arg2[%c0_1, %c0_2] : memref<16x16xf32, #tpu.memory_space<vmem>>, vector<16x16xf32>
    %cst = arith.constant dense<0.000000e+00> : vector<8x16xf32>
    %2 = tpu.matmul %0, %1, %cst {dimension_numbers = #tpu.dot_dimension_numbers<[1], [0], [0], [1], [0, 0, 1, 1], [], []>} : vector<8x16xf32>, vector<16x16xf32>, vector<8x16xf32> -> vector<8x16xf32>
    %c0_3 = arith.constant 0 : index
    %c0_4 = arith.constant 0 : index
    %3 = vector.load %arg3[%c0_3, %c0_4] : memref<1x16xf32, #tpu.memory_space<vmem>>, vector<1x16xf32>
    %4 = vector.broadcast %3 : vector<1x16xf32> to vector<8x16xf32>
    %5 = arith.addf %2, %4 : vector<8x16xf32>
    %c0_5 = arith.constant 0 : index
    %c0_6 = arith.constant 0 : index
    %6 = vector.load %arg4[%c0_5, %c0_6] : memref<8x16xf32, #tpu.memory_space<vmem>>, vector<8x16xf32>
    tpu.vector_store %arg4[%c0_5, %c0_6], %5 {strides = array<i32>} : memref<8x16xf32, #tpu.memory_space<vmem>>, vector<8x16xf32>,
    return
  }
  func.func @transform_0(%arg0: i32) -> (i32, i32) {
    %c0_i32 = arith.constant 0 : i32
    %c0_i32_0 = arith.constant 0 : i32
    return %arg0, %c0_i32 : i32, i32
  }
  func.func @transform_1(%arg0: i32) -> (i32, i32) {
    %c0_i32 = arith.constant 0 : i32
    %c0_i32_0 = arith.constant 0 : i32
    %c0_i32_1 = arith.constant 0 : i32
    return %c0_i32, %c0_i32_0 : i32, i32
  }
  func.func @transform_2(%arg0: i32) -> (i32, i32) {
    %c0_i32 = arith.constant 0 : i32
    %c0_i32_0 = arith.constant 0 : i32
    %c0_i32_1 = arith.constant 0 : i32
    return %c0_i32, %c0_i32_0 : i32, i32
  }
  func.func @transform_3(%arg0: i32) -> (i32, i32) {
    %c0_i32 = arith.constant 0 : i32
    %c0_i32_0 = arith.constant 0 : i32
    return %arg0, %c0_i32 : i32, i32
  }
}

</mosaic_0001>

<llo_original>
// kernel: tpu_custom_call.1
$region0: #{tpu_custom_call.1}
  #allocation0 [shape = 'u32[]', space=smem, size = 0x4, offset = 0x4, fixed_abs, tag = 'smem constant byte address 0x4 - core index']
  #allocation1 [shape = 'u32[144,128]{1,0:T(1,128)}', space=vmem, size = 0x12000, scoped, tag = 'internal scratch']
  %s0 = inlined_call_operand.hbm [shape: f32[8,16], index: 0, kind: input, shape index: {}]
  %s1 = inlined_call_operand.hbm [shape: f32[16,16], index: 1, kind: input, shape index: {}]
  %s2 = inlined_call_operand.vmem [shape: f32[1,16], index: 2, kind: input, shape index: {}]
  %s3 = inlined_call_operand.hbm [shape: f32[8,16], index: 3, kind: output, shape index: {}]
  %s4 = sld [smem:[#allocation0]]
  $region30: #{tpu_custom_call.1} parent=0
    _
  %s6 = ssub.s32 1, %s4
  %s7 = scalar_select 0, %s6, %s4
  $region1: #{tpu_custom_call.1} parent=0
    #allocation2 [shape = 'u8[4096]{0}', space=vmem, size = 0x1000, scoped, tag = 'input window, operand 0, single buffered']
    #allocation3 [shape = 's32[1]{0}', space=sflag, size = 0x4, scoped, tag = 'scoped memory for tpu_custom_call.1']
    #allocation4 [shape = 's32[1]{0}', space=sflag, size = 0x4, scoped, tag = 'scoped memory for tpu_custom_call.1']
    #allocation5 [shape = 'u8[8192]{0}', space=vmem, size = 0x2000, scoped, tag = 'input window, operand 1, single buffered']
    #allocation6 [shape = 's32[1]{0}', space=sflag, size = 0x4, scoped, tag = 'scoped memory for tpu_custom_call.1']
    #allocation7 [shape = 'u8[4096]{0}', space=vmem, size = 0x1000, scoped, tag = 'output window, operand 0, single buffered']
    %8 = vsyncpa [#allocation3], 0
    %9 = vsyncpa [#allocation6], 0
    %10 = vsyncpa [#allocation4], 0
    // Predicated region
    $region2: #{tpu_custom_call.1} parent=1 // pred_check
      _
    $region3: #{tpu_custom_call.1} parent=1 // pred_check_branch
      %12 = sbr.rel (0) target = $region5
    $region4: #{tpu_custom_call.1} parent=1 // pred_region
      %s14 = ssub.s32 128, 128
      %15 = vsyncadd [#allocation3], %s14
      %s17 = sshll.u32 [#allocation2], 4
      %s18 = int_to_ptr.vmem [resolvable:$true] %s17
      %20 = dma.hbm_to_vmem [thread:$0]  %s0, 128, %s18, [#allocation3]
    $region5: #{tpu_custom_call.1} parent=1 // pred_fallthru
      _
    // Predicated region
    $region6: #{tpu_custom_call.1} parent=1 // pred_check
      _
    $region7: #{tpu_custom_call.1} parent=1 // pred_check_branch
      %22 = sbr.rel (0) target = $region9
    $region8: #{tpu_custom_call.1} parent=1 // pred_region
      %s24 = ssub.s32 256, 256
      %25 = vsyncadd [#allocation6], %s24
      %s26 = sshll.u32 [#allocation5], 4
      %s27 = int_to_ptr.vmem [resolvable:$true] %s26
      %32 = dma.hbm_to_vmem [thread:$0]  %s1, 256, %s27, [#allocation6], 128, 128, 8
    $region9: #{tpu_custom_call.1} parent=1 // pred_fallthru
      _
    // Predicated region
    $region10: #{tpu_custom_call.1} parent=1 // pred_check
      _
    $region11: #{tpu_custom_call.1} parent=1 // pred_check_branch
      %34 = sbr.rel (0) target = $region13
    $region12: #{tpu_custom_call.1} parent=1 // pred_region
      _
    $region13: #{tpu_custom_call.1} parent=1 // pred_fallthru
      _
    // Predicated region
    $region14: #{tpu_custom_call.1} parent=1 // pred_check
      _
    $region15: #{tpu_custom_call.1} parent=1 // pred_check_branch
      %36 = sbr.rel (0) target = $region17
    $region16: #{tpu_custom_call.1} parent=1 // pred_region
      %37 = dma.done [#allocation3], 128
    $region17: #{tpu_custom_call.1} parent=1 // pred_fallthru
      _
    // Predicated region
    $region18: #{tpu_custom_call.1} parent=1 // pred_check
      _
    $region19: #{tpu_custom_call.1} parent=1 // pred_check_branch
      %39 = sbr.rel (0) target = $region21
    $region20: #{tpu_custom_call.1} parent=1 // pred_region
      %40 = dma.done [#allocation6], 256
    $region21: #{tpu_custom_call.1} parent=1 // pred_fallthru
      _
    %v41 = vld [vmem:[#allocation2] sm:$0xff]
    %v42 = vld [vmem:[#allocation5] sm:$0xff]
    %v43 = vld [vmem:[#allocation5 + $0x8] sm:$0xff]
    %v44 = vld [vmem:[%s2] sm:$0x1]
    %v46 = vlaneseq
    %v47 = vshrl.u32 %v46, 7
    %v48 = vsub.s32 0, %v47
    %v49 = vrot.slane %v44, %v48
    %vm51 = vcmask 130048
    %v53 = vsel %vm51, %v41, 0
    %55 = vmatprep.subr.mxu0 0.0
    %56 = vmatpush1.msra.mxu0 0.0
    %57 = vmatprep.subr.mxu0 0.0
    %58 = vmatpush1.msra.mxu0 0.0
    %59 = vmatprep.subr.mxu0 0.0
    %60 = vmatpush1.msra.mxu0 0.0
    %61 = vmatprep.subr.mxu0 0.0
    %62 = vmatpush1.msra.mxu0 0.0
    %63 = vmatprep.subr.mxu0 0.0
    %64 = vmatpush1.msra.mxu0 0.0
    %65 = vmatprep.subr.mxu0 0.0
    %66 = vmatpush1.msra.mxu0 0.0
    %67 = vmatprep.subr.mxu0 0.0
    %68 = vmatpush1.msra.mxu0 0.0
    %69 = vmatprep.subr.mxu0 0.0
    %70 = vmatpush1.msra.mxu0 0.0
    %71 = vmatprep.subr.mxu0 0.0
    %72 = vmatpush1.msra.mxu0 0.0
    %73 = vmatprep.subr.mxu0 0.0
    %74 = vmatpush1.msra.mxu0 0.0
    %75 = vmatprep.subr.mxu0 0.0
    %76 = vmatpush1.msra.mxu0 0.0
    %77 = vmatprep.subr.mxu0 0.0
    %78 = vmatpush1.msra.mxu0 0.0
    %79 = vmatprep.subr.mxu0 0.0
    %80 = vmatpush1.msra.mxu0 0.0
    %81 = vmatprep.subr.mxu0 0.0
    %82 = vmatpush1.msra.mxu0 0.0
    %83 = vmatprep.subr.mxu0 0.0
    %84 = vmatpush1.msra.mxu0 %v43
    %85 = vmatprep.subr.mxu0 0.0
    %86 = vmatpush1.msra.mxu0 %v42
    %87 = vmatprep.subr.mxu0 0.0
    %88 = vmatpush2.msra.mxu0 0.0
    %89 = vmatprep.subr.mxu0 0.0
    %90 = vmatpush2.msra.mxu0 0.0
    %91 = vmatprep.subr.mxu0 0.0
    %92 = vmatpush2.msra.mxu0 0.0
    %93 = vmatprep.subr.mxu0 0.0
    %94 = vmatpush2.msra.mxu0 0.0
    %95 = vmatprep.subr.mxu0 0.0
    %96 = vmatpush2.msra.mxu0 0.0
    %97 = vmatprep.subr.mxu0 0.0
    %98 = vmatpush2.msra.mxu0 0.0
    %99 = vmatprep.subr.mxu0 0.0
    %100 = vmatpush2.msra.mxu0 0.0
    %101 = vmatprep.subr.mxu0 0.0
    %102 = vmatpush2.msra.mxu0 0.0
    %103 = vmatprep.subr.mxu0 0.0
    %104 = vmatpush2.msra.mxu0 0.0
    %105 = vmatprep.subr.mxu0 0.0
    %106 = vmatpush2.msra.mxu0 0.0
    %107 = vmatprep.subr.mxu0 0.0
    %108 = vmatpush2.msra.mxu0 0.0
    %109 = vmatprep.subr.mxu0 0.0
    %110 = vmatpush2.msra.mxu0 0.0
    %111 = vmatprep.subr.mxu0 0.0
    %112 = vmatpush2.msra.mxu0 0.0
    %113 = vmatprep.subr.mxu0 0.0
    %114 = vmatpush2.msra.mxu0 0.0
    %115 = vmatprep.subr.mxu0 0.0
    %116 = vmatpush2.msra.mxu0 0.0
    %117 = vmatprep.subr.mxu0 0.0
    %118 = vmatpush2.msra.mxu0 0.0
    %119 = vmatprep.mubr.f32.mxu0 0.0
    %120 = vmatmul.mubr.f32.gmra.mxu0 %v53
    %v121 = vpop.f32.mrf.mxu0
    %v122 = vadd.f32 %v49, %v121
    %v123 = vpop.f32.mrf.mxu0
    %124 = vdwg.mxu0
    %125 = vst.msk [vmem:[#allocation7] sm:$0xff] %vm51, %v122
    // Predicated region
    $region22: #{tpu_custom_call.1} parent=1 // pred_check
      _
    $region23: #{tpu_custom_call.1} parent=1 // pred_check_branch
      %127 = sbr.rel (0) target = $region25
    $region24: #{tpu_custom_call.1} parent=1 // pred_region
      %s129 = ssub.s32 128, 128
      %130 = vsyncadd [#allocation4], %s129
      %s132 = sshll.u32 [#allocation7], 4
      %s133 = int_to_ptr.vmem [resolvable:$true] %s132
      %135 = dma.vmem_to_hbm [thread:$0]  %s133, 128, %s3, [#allocation4]
    $region25: #{tpu_custom_call.1} parent=1 // pred_fallthru
      _
    // Predicated region
    $region26: #{tpu_custom_call.1} parent=1 // pred_check
      _
    $region27: #{tpu_custom_call.1} parent=1 // pred_check_branch
      %137 = sbr.rel (0) target = $region29
    $region28: #{tpu_custom_call.1} parent=1 // pred_region
      %138 = dma.done [#allocation4], 128
    $region29: #{tpu_custom_call.1} parent=1 // pred_fallthru
      _
    %139 = vsyncpa [#allocation3], 1
    %140 = vsyncpa [#allocation6], 1
    %141 = vsyncpa [#allocation4], 1

</llo_original>
